<compile_context>
chip_gen: v7x
topology: tpu7x:2x2x1
jax: 0.10.0
libtpu: 0.0.40
codegen_flags: <defaults>
</compile_context>

<pallas_src>
import functools
import math

import jax
import jax.numpy as jnp
from jax.experimental import pallas as pl
from jax.experimental.pallas import tpu as pltpu

_TWO_PI = 2.0 * math.pi


def _round_up(n, m):
    return ((n + m - 1) // m) * m


def gfp_kernel(x_ref, w_ref, o_ref):
    # x_ref: (TB, 1) f32, w_ref: (1, E) f32, o_ref: (TB, 2E) f32
    w = w_ref[...] * _TWO_PI                 # scale the small (1, E) tile once
    e = w.shape[1]
    x_proj = x_ref[...] * w                  # broadcast -> (TB, E)
    o_ref[:, :e] = jnp.sin(x_proj)           # lane-aligned half-writes (E % 128 == 0)
    o_ref[:, e:] = jnp.cos(x_proj)


def gaussian_fourier_projection(x, w, *, block_b=256):
    """x: (B,) noise levels, w: (E,) fixed Gaussian weights -> (B, 2E)."""
    B = x.shape[0]
    E = w.shape[0]

    # Batch tile: multiple of 8 sublanes, capped at block_b.
    tb = min(block_b, _round_up(B, 8))
    b_pad = _round_up(B, tb)

    x2 = x.reshape(B, 1).astype(jnp.float32)
    if b_pad != B:
        x2 = jnp.pad(x2, ((0, b_pad - B), (0, 0)))
    w2 = w.reshape(1, E).astype(jnp.float32)

    grid = (b_pad // tb,)
    cost = pl.CostEstimate(
        flops=2 * b_pad * E,                      # two multiplies per element
        transcendentals=2 * b_pad * E,            # sin + cos
        bytes_accessed=4 * (b_pad + E + 2 * b_pad * E),
    )

    out = pl.pallas_call(
        gfp_kernel,
        out_shape=jax.ShapeDtypeStruct((b_pad, 2 * E), jnp.float32),
        grid=grid,
        in_specs=[
            pl.BlockSpec((tb, 1), lambda i: (i, 0)),        # x tile (per batch block)
            pl.BlockSpec((1, E), lambda i: (0, 0)),         # W, grid-invariant
        ],
        out_specs=pl.BlockSpec((tb, 2 * E), lambda i: (i, 0)),
        compiler_params=pltpu.CompilerParams(
            dimension_semantics=("parallel",)),             # batch tiles -> both TCs on v7x
        cost_estimate=cost,
    )(x2, w2)

    return out[:B]


def gfp_ref(x, w):
    """Pure-JAX reference mirroring the PyTorch forward."""
    x_proj = x[:, None] * w[None, :] * _TWO_PI
    return jnp.concatenate([jnp.sin(x_proj), jnp.cos(x_proj)], axis=-1)


if __name__ == "__main__":
    B = 8
    E = 256          # module default embedding_size
    scale = 1.0

    key = jax.random.PRNGKey(0)
    kx, kw = jax.random.split(key)
    x = jax.random.normal(kx, (B,), dtype=jnp.float32)
    W = (scale * jax.random.normal(kw, (E,))).astype(jnp.float32)  # frozen param

    out = gaussian_fourier_projection(x, W)
    out = jax.block_until_ready(out)

    ref = gfp_ref(x, W)
    assert out.shape == (B, 2 * E)
    assert jnp.allclose(out, ref, atol=1e-4, rtol=1e-4), \
        f"max err {jnp.max(jnp.abs(out - ref))}"

    print("KERNEL_OK")
</pallas_src>

<mosaic_0001>
module attributes {stable_mosaic.version = 11 : i64} {
  func.func @gfp_kernel(%arg0: i32, %arg1: memref<8x1xf32, #tpu.memory_space<vmem>>, %arg2: memref<1x256xf32, #tpu.memory_space<vmem>>, %arg3: memref<8x512xf32, #tpu.memory_space<vmem>>) attributes {dimension_semantics = [#tpu.dimension_semantics<parallel>], iteration_bounds = array<i64: 1>, scalar_prefetch = 0 : i64, scratch_operands = 0 : i64, tpu.core_type = #tpu.core_type<tc>, window_params = [{transform_indices = @transform_0, window_bounds = array<i64: 8, 1>}, {pipeline_mode = #tpu.pipeline_mode<synchronous>, transform_indices = @transform_1, window_bounds = array<i64: 1, 256>}, {transform_indices = @transform_2, window_bounds = array<i64: 8, 512>}]} {
    %c0 = arith.constant 0 : index
    %c0_0 = arith.constant 0 : index
    %0 = vector.load %arg2[%c0, %c0_0] : memref<1x256xf32, #tpu.memory_space<vmem>>, vector<1x256xf32>
    %cst = arith.constant 6.28318548 : f32
    %1 = vector.broadcast %cst : f32 to vector<1x256xf32>
    %2 = arith.mulf %0, %1 : vector<1x256xf32>
    %c0_1 = arith.constant 0 : index
    %c0_2 = arith.constant 0 : index
    %3 = vector.load %arg1[%c0_1, %c0_2] : memref<8x1xf32, #tpu.memory_space<vmem>>, vector<8x1xf32>
    %4 = vector.broadcast %3 : vector<8x1xf32> to vector<8x256xf32>
    %5 = vector.broadcast %2 : vector<1x256xf32> to vector<8x256xf32>
    %6 = arith.mulf %4, %5 : vector<8x256xf32>
    %7 = math.sin %6 : vector<8x256xf32>
    %c0_3 = arith.constant 0 : index
    %c0_4 = arith.constant 0 : index
    %8 = vector.load %arg3[%c0_3, %c0_4] : memref<8x512xf32, #tpu.memory_space<vmem>>, vector<8x256xf32>
    tpu.vector_store %arg3[%c0_3, %c0_4], %7 {strides = array<i32>} : memref<8x512xf32, #tpu.memory_space<vmem>>, vector<8x256xf32>,
    %9 = math.cos %6 : vector<8x256xf32>
    %c0_5 = arith.constant 0 : index
    %c256 = arith.constant 256 : index
    %10 = vector.load %arg3[%c0_5, %c256] : memref<8x512xf32, #tpu.memory_space<vmem>>, vector<8x256xf32>
    tpu.vector_store %arg3[%c0_5, %c256], %9 {strides = array<i32>} : memref<8x512xf32, #tpu.memory_space<vmem>>, vector<8x256xf32>,
    return
  }
  func.func @transform_0(%arg0: i32) -> (i32, i32) {
    %c0_i32 = arith.constant 0 : i32
    %c0_i32_0 = arith.constant 0 : i32
    return %arg0, %c0_i32 : i32, i32
  }
  func.func @transform_1(%arg0: i32) -> (i32, i32) {
    %c0_i32 = arith.constant 0 : i32
    %c0_i32_0 = arith.constant 0 : i32
    %c0_i32_1 = arith.constant 0 : i32
    return %c0_i32, %c0_i32_0 : i32, i32
  }
  func.func @transform_2(%arg0: i32) -> (i32, i32) {
    %c0_i32 = arith.constant 0 : i32
    %c0_i32_0 = arith.constant 0 : i32
    return %arg0, %c0_i32 : i32, i32
  }
}

</mosaic_0001>

<llo_original>
// kernel: tpu_custom_call.1
$region0: #{tpu_custom_call.1}
  #allocation0 [shape = 'u32[]', space=smem, size = 0x4, offset = 0x4, fixed_abs, tag = 'smem constant byte address 0x4 - core index']
  #allocation1 [shape = 'u32[144,128]{1,0:T(1,128)}', space=vmem, size = 0x12000, scoped, tag = 'internal scratch']
  %s0 = inlined_call_operand.vmem [shape: f32[8,1], index: 0, kind: input, shape index: {}]
  %s1 = inlined_call_operand.vmem [shape: f32[1,256], index: 1, kind: input, shape index: {}]
  %s2 = inlined_call_operand.hbm [shape: f32[8,512], index: 2, kind: output, shape index: {}]
  %s3 = sld [smem:[#allocation0]]
  $region18: #{tpu_custom_call.1} parent=0
    _
  %s5 = ssub.s32 1, %s3
  %s6 = scalar_select 0, %s5, %s3
  $region1: #{tpu_custom_call.1} parent=0
    #allocation2 [shape = 'u8[16384]{0}', space=vmem, size = 0x4000, scoped, tag = 'output window, operand 0, single buffered']
    #allocation3 [shape = 's32[1]{0}', space=sflag, size = 0x4, scoped, tag = 'scoped memory for tpu_custom_call.1']
    %7 = vsyncpa [#allocation3], 0
    // Predicated region
    $region2: #{tpu_custom_call.1} parent=1 // pred_check
      _
    $region3: #{tpu_custom_call.1} parent=1 // pred_check_branch
      %9 = sbr.rel (0) target = $region5
    $region4: #{tpu_custom_call.1} parent=1 // pred_region
      _
    $region5: #{tpu_custom_call.1} parent=1 // pred_fallthru
      _
    // Predicated region
    $region6: #{tpu_custom_call.1} parent=1 // pred_check
      _
    $region7: #{tpu_custom_call.1} parent=1 // pred_check_branch
      %11 = sbr.rel (0) target = $region9
    $region8: #{tpu_custom_call.1} parent=1 // pred_region
      _
    $region9: #{tpu_custom_call.1} parent=1 // pred_fallthru
      _
    %v12 = vld [vmem:[%s1] sm:$0x3]
    %v13 = vmul.f32 %v12, 6.2831855
    %v14 = vld [vmem:[%s0] sm:$0xff]
    %16 = vset.pattern.permute.xlu0 0
    %17 = vperm.xlu0 %16, %v14
    %v18 = vpop.permute.xlu0 %17
    %v21 = vlaneseq
    %v22 = vshrl.u32 %v21, 7
    %v23 = vsub.s32 0, %v22
    %v24 = vrot.slane %v13, %v23
    %v25 = vlaneseq
    %v26 = vshrl.u32 %v25, 7
    %v27 = vsub.s32 1, %v26
    %v28 = vrot.slane %v13, %v27
    %v31 = vmul.f32 %v18, %v24
    %v32 = vmul.f32 %v18, %v28
    %v33 = vand.u32 2147483647, %v31
    %vm34 = vcmp.le.f32.partialorder %v33, 0.7853982
    %vm35 = vcmp.lt.s32.totalorder %v31, 0
    %v36 = vand.u32 %v31, 2139095040
    %v37 = vshrl.u32 %v36, 23
    %v38 = vsub.s32 %v37, 127
    %v39 = vand.u32 2147483647, %v31
    %v40 = vand.u32 %v39, 8388607
    %v41 = vor.u32 %v40, 8388608
    %v42 = vsub.s32 0, %v41
    %v43 = vadd.s32 %v38, 1
    %vm44 = vcmp.gt.s32.totalorder %v43, 0
    %v45 = vsel %vm44, %v43, 0
    %v46 = vshrl.u32 %v45, 5
    %v47 = vand.u32 %v45, 31
    %v48 = vsub.s32 32, %v47
    %v49 = vshrl.u32 683565275, %v48
    %v50 = vshll.u32 683565275, %v47
    %v51 = vshrl.u32 2475754826, %v48
    %v52 = vor.u32 %v50, %v51
    %v53 = vshll.u32 2475754826, %v47
    %v54 = vshrl.u32 2131351028, %v48
    %v55 = vor.u32 %v53, %v54
    %v56 = vshll.u32 2131351028, %v47
    %v57 = vshrl.u32 2102212464, %v48
    %v58 = vor.u32 %v56, %v57
    %v59 = vshll.u32 2102212464, %v47
    %v60 = vshrl.u32 920167782, %v48
    %v61 = vor.u32 %v59, %v60
    %v62 = vshll.u32 920167782, %v47
    %v63 = vshrl.u32 1326507024, %v48
    %v64 = vor.u32 %v62, %v63
    %vm65 = vcmp.lt.s32.totalorder %v46, 1
    %vm66 = vcmp.lt.s32.totalorder %v46, 2
    %vm67 = vcmp.lt.s32.totalorder %v46, 3
    %vm68 = vcmp.lt.s32.totalorder %v46, 4
    %v69 = vsel %vm65, %v49, %v52
    %v70 = vsel %vm68, %v58, 2102212464
    %v71 = vsel %vm67, %v55, %v70
    %v72 = vsel %vm66, %v69, %v71
    %v73 = vsel %vm65, %v52, %v55
    %v74 = vsel %vm68, %v61, 920167782
    %v75 = vsel %vm67, %v58, %v74
    %v76 = vsel %vm66, %v73, %v75
    %v77 = vsel %vm65, %v55, %v58
    %v78 = vsel %vm68, %v64, 1326507024
    %v79 = vsel %vm67, %v61, %v78
    %v80 = vsel %vm66, %v77, %v79
    %v81 = vshll.u32 %v41, 8
    %v82 = vmul.u32.u64.compose %v81, %v80
    %v83 = vextract.low.u32 %v82
    %v84 = vextract.high.u32 %v82
    %v85 = vmul.u32.u64.compose %v81, %v76
    %v86 = vextract.low.u32 %v85
    %v87 = vextract.high.u32 %v85
    %v88 = vmul.u32 %v81, %v72
    %v89 = vadd.s32 %v84, %v86
    %vm90 = vc.u32 %v84, %v86
    %v91 = vadd.s32 %v87, 1
    %v92 = vsel %vm90, %v91, %v87
    %v93 = vadd.s32 %v88, %v92
    %v94 = vadd.s32 %v93, 536870912
    %v95 = vshrl.u32 %v94, 30
    %v96 = vshll.u32 %v95, 30
    %v97 = vsub.s32 %v93, %v96
    %vm98 = vcmp.lt.s32.totalorder %v97, 0
    %v99 = vsub.s32 0, %v97
    %v100 = vsel %vm98, %v99, %v97
    %v101 = vclz %v100
    %v102 = vsub.s32 %v101, 2
    %vm103 = vcmp.gt.s32.totalorder 0, %v102
    %v104 = vsel %vm103, 0, %v102
    %v105 = vsub.s32 32, %v104
    %v106 = vshll.u32 %v97, %v104
    %v107 = vshrl.u32 %v89, %v105
    %v108 = vor.u32 %v106, %v107
    %v109 = vsub.s32 4294967266, %v104
    %v110 = vadd.s32 %v109, 127
    %v111 = vshll.u32 %v110, 23
    %v112 = vor.u32 4788187, %v111
    %v113 = vand.u32 2147483647, %v112
    %v115 = vcvt.s32.f32 %v108
    %v116 = vmul.f32 %v115, %v113
    %v117 = vxor.u32 %v116, 2147483648
    %v118 = vsel %vm35, %v117, %v116
    %v119 = vsub.s32 4, %v95
    %v120 = vsel %vm35, %v119, %v95
    %v121 = vsel %vm34, %v31, %v118
    %v122 = vsel %vm34, 0, %v120
    %v123 = vcosq.f32.pop %v121
    %v124 = vsinq.f32.pop %v121
    %vm125 = vweird.f32 %v31
    %v126 = vadd.s32 %v122, 3
    %v127 = vand.u32 %v126, 3
    %vm128 = vcmp.lt.s32.totalorder %v127, 2
    %vm129 = vcmp.eq.s32.totalorder %v127, 0
    %v130 = vxor.u32 %v124, 2147483648
    %v131 = vsel %vm129, %v123, %v130
    %vm132 = vcmp.eq.s32.totalorder %v127, 2
    %v133 = vxor.u32 %v123, 2147483648
    %v134 = vsel %vm132, %v133, %v124
    %v135 = vsel %vm128, %v131, %v134
    %v136 = vsel %vm125, nan, %v135
    %v137 = vand.u32 2147483647, %v32
    %vm138 = vcmp.le.f32.partialorder %v137, 0.7853982
    %vm139 = vcmp.lt.s32.totalorder %v32, 0
    %v140 = vand.u32 %v32, 2139095040
    %v141 = vshrl.u32 %v140, 23
    %v142 = vsub.s32 %v141, 127
    %v143 = vand.u32 2147483647, %v32
    %v144 = vand.u32 %v143, 8388607
    %v145 = vor.u32 %v144, 8388608
    %v146 = vsub.s32 0, %v145
    %v147 = vadd.s32 %v142, 1
    %vm148 = vcmp.gt.s32.totalorder %v147, 0
    %v149 = vsel %vm148, %v147, 0
    %v150 = vshrl.u32 %v149, 5
    %v151 = vand.u32 %v149, 31
    %v152 = vsub.s32 32, %v151
    %v153 = vshrl.u32 683565275, %v152
    %v154 = vshll.u32 683565275, %v151
    %v155 = vshrl.u32 2475754826, %v152
    %v156 = vor.u32 %v154, %v155
    %v157 = vshll.u32 2475754826, %v151
    %v158 = vshrl.u32 2131351028, %v152
    %v159 = vor.u32 %v157, %v158
    %v160 = vshll.u32 2131351028, %v151
    %v161 = vshrl.u32 2102212464, %v152
    %v162 = vor.u32 %v160, %v161
    %v163 = vshll.u32 2102212464, %v151
    %v164 = vshrl.u32 920167782, %v152
    %v165 = vor.u32 %v163, %v164
    %v166 = vshll.u32 920167782, %v151
    %v167 = vshrl.u32 1326507024, %v152
    %v168 = vor.u32 %v166, %v167
    %vm169 = vcmp.lt.s32.totalorder %v150, 1
    %vm170 = vcmp.lt.s32.totalorder %v150, 2
    %vm171 = vcmp.lt.s32.totalorder %v150, 3
    %vm172 = vcmp.lt.s32.totalorder %v150, 4
    %v173 = vsel %vm169, %v153, %v156
    %v174 = vsel %vm172, %v162, 2102212464
    %v175 = vsel %vm171, %v159, %v174
    %v176 = vsel %vm170, %v173, %v175
    %v177 = vsel %vm169, %v156, %v159
    %v178 = vsel %vm172, %v165, 920167782
    %v179 = vsel %vm171, %v162, %v178
    %v180 = vsel %vm170, %v177, %v179
    %v181 = vsel %vm169, %v159, %v162
    %v182 = vsel %vm172, %v168, 1326507024
    %v183 = vsel %vm171, %v165, %v182
    %v184 = vsel %vm170, %v181, %v183
    %v185 = vshll.u32 %v145, 8
    %v186 = vmul.u32.u64.compose %v185, %v184
    %v187 = vextract.low.u32 %v186
    %v188 = vextract.high.u32 %v186
    %v189 = vmul.u32.u64.compose %v185, %v180
    %v190 = vextract.low.u32 %v189
    %v191 = vextract.high.u32 %v189
    %v192 = vmul.u32 %v185, %v176
    %v193 = vadd.s32 %v188, %v190
    %vm194 = vc.u32 %v188, %v190
    %v195 = vadd.s32 %v191, 1
    %v196 = vsel %vm194, %v195, %v191
    %v197 = vadd.s32 %v192, %v196
    %v198 = vadd.s32 %v197, 536870912
    %v199 = vshrl.u32 %v198, 30
    %v200 = vshll.u32 %v199, 30
    %v201 = vsub.s32 %v197, %v200
    %vm202 = vcmp.lt.s32.totalorder %v201, 0
    %v203 = vsub.s32 0, %v201
    %v204 = vsel %vm202, %v203, %v201
    %v205 = vclz %v204
    %v206 = vsub.s32 %v205, 2
    %vm207 = vcmp.gt.s32.totalorder 0, %v206
    %v208 = vsel %vm207, 0, %v206
    %v209 = vsub.s32 32, %v208
    %v210 = vshll.u32 %v201, %v208
    %v211 = vshrl.u32 %v193, %v209
    %v212 = vor.u32 %v210, %v211
    %v213 = vsub.s32 4294967266, %v208
    %v214 = vadd.s32 %v213, 127
    %v215 = vshll.u32 %v214, 23
    %v216 = vor.u32 4788187, %v215
    %v217 = vand.u32 2147483647, %v216
    %v219 = vcvt.s32.f32 %v212
    %v220 = vmul.f32 %v219, %v217
    %v221 = vxor.u32 %v220, 2147483648
    %v222 = vsel %vm139, %v221, %v220
    %v223 = vsub.s32 4, %v199
    %v224 = vsel %vm139, %v223, %v199
    %v225 = vsel %vm138, %v32, %v222
    %v226 = vsel %vm138, 0, %v224
    %v227 = vcosq.f32.pop %v225
    %v228 = vsinq.f32.pop %v225
    %vm229 = vweird.f32 %v32
    %v230 = vadd.s32 %v226, 3
    %v231 = vand.u32 %v230, 3
    %vm232 = vcmp.lt.s32.totalorder %v231, 2
    %vm233 = vcmp.eq.s32.totalorder %v231, 0
    %v234 = vxor.u32 %v228, 2147483648
    %v235 = vsel %vm233, %v227, %v234
    %vm236 = vcmp.eq.s32.totalorder %v231, 2
    %v237 = vxor.u32 %v227, 2147483648
    %v238 = vsel %vm236, %v237, %v228
    %v239 = vsel %vm232, %v235, %v238
    %v240 = vsel %vm229, nan, %v239
    %241 = vst [vmem:[#allocation2] sm:$0xff] %v136
    %242 = vst [vmem:[#allocation2 + $0x8] sm:$0xff] %v240
    %v243 = vand.u32 2147483647, %v31
    %vm244 = vcmp.le.f32.partialorder %v243, 0.7853982
    %vm245 = vcmp.lt.s32.totalorder %v31, 0
    %v246 = vand.u32 %v31, 2139095040
    %v247 = vshrl.u32 %v246, 23
    %v248 = vsub.s32 %v247, 127
    %v249 = vand.u32 2147483647, %v31
    %v250 = vand.u32 %v249, 8388607
    %v251 = vor.u32 %v250, 8388608
    %v252 = vsub.s32 0, %v251
    %v253 = vadd.s32 %v248, 1
    %vm254 = vcmp.gt.s32.totalorder %v253, 0
    %v255 = vsel %vm254, %v253, 0
    %v256 = vshrl.u32 %v255, 5
    %v257 = vand.u32 %v255, 31
    %v258 = vsub.s32 32, %v257
    %v259 = vshrl.u32 683565275, %v258
    %v260 = vshll.u32 683565275, %v257
    %v261 = vshrl.u32 2475754826, %v258
    %v262 = vor.u32 %v260, %v261
    %v263 = vshll.u32 2475754826, %v257
    %v264 = vshrl.u32 2131351028, %v258
    %v265 = vor.u32 %v263, %v264
    %v266 = vshll.u32 2131351028, %v257
    %v267 = vshrl.u32 2102212464, %v258
    %v268 = vor.u32 %v266, %v267
    %v269 = vshll.u32 2102212464, %v257
    %v270 = vshrl.u32 920167782, %v258
    %v271 = vor.u32 %v269, %v270
    %v272 = vshll.u32 920167782, %v257
    %v273 = vshrl.u32 1326507024, %v258
    %v274 = vor.u32 %v272, %v273
    %vm275 = vcmp.lt.s32.totalorder %v256, 1
    %vm276 = vcmp.lt.s32.totalorder %v256, 2
    %vm277 = vcmp.lt.s32.totalorder %v256, 3
    %vm278 = vcmp.lt.s32.totalorder %v256, 4
    %v279 = vsel %vm275, %v259, %v262
    %v280 = vsel %vm278, %v268, 2102212464
    %v281 = vsel %vm277, %v265, %v280
    %v282 = vsel %vm276, %v279, %v281
    %v283 = vsel %vm275, %v262, %v265
    %v284 = vsel %vm278, %v271, 920167782
    %v285 = vsel %vm277, %v268, %v284
    %v286 = vsel %vm276, %v283, %v285
    %v287 = vsel %vm275, %v265, %v268
    %v288 = vsel %vm278, %v274, 1326507024
    %v289 = vsel %vm277, %v271, %v288
    %v290 = vsel %vm276, %v287, %v289
    %v291 = vshll.u32 %v251, 8
    %v292 = vmul.u32.u64.compose %v291, %v290
    %v293 = vextract.low.u32 %v292
    %v294 = vextract.high.u32 %v292
    %v295 = vmul.u32.u64.compose %v291, %v286
    %v296 = vextract.low.u32 %v295
    %v297 = vextract.high.u32 %v295
    %v298 = vmul.u32 %v291, %v282
    %v299 = vadd.s32 %v294, %v296
    %vm300 = vc.u32 %v294, %v296
    %v301 = vadd.s32 %v297, 1
    %v302 = vsel %vm300, %v301, %v297
    %v303 = vadd.s32 %v298, %v302
    %v304 = vadd.s32 %v303, 536870912
    %v305 = vshrl.u32 %v304, 30
    %v306 = vshll.u32 %v305, 30
    %v307 = vsub.s32 %v303, %v306
    %vm308 = vcmp.lt.s32.totalorder %v307, 0
    %v309 = vsub.s32 0, %v307
    %v310 = vsel %vm308, %v309, %v307
    %v311 = vclz %v310
    %v312 = vsub.s32 %v311, 2
    %vm313 = vcmp.gt.s32.totalorder 0, %v312
    %v314 = vsel %vm313, 0, %v312
    %v315 = vsub.s32 32, %v314
    %v316 = vshll.u32 %v307, %v314
    %v317 = vshrl.u32 %v299, %v315
    %v318 = vor.u32 %v316, %v317
    %v319 = vsub.s32 4294967266, %v314
    %v320 = vadd.s32 %v319, 127
    %v321 = vshll.u32 %v320, 23
    %v322 = vor.u32 4788187, %v321
    %v323 = vand.u32 2147483647, %v322
    %v325 = vcvt.s32.f32 %v318
    %v326 = vmul.f32 %v325, %v323
    %v327 = vxor.u32 %v326, 2147483648
    %v328 = vsel %vm245, %v327, %v326
    %v329 = vsub.s32 4, %v305
    %v330 = vsel %vm245, %v329, %v305
    %v331 = vsel %vm244, %v31, %v328
    %v332 = vsel %vm244, 0, %v330
    %v333 = vcosq.f32.pop %v331
    %v334 = vsinq.f32.pop %v331
    %vm335 = vweird.f32 %v31
    %v336 = vand.u32 %v332, 3
    %vm337 = vcmp.lt.s32.totalorder %v336, 2
    %vm338 = vcmp.eq.s32.totalorder %v336, 0
    %v339 = vxor.u32 %v334, 2147483648
    %v340 = vsel %vm338, %v333, %v339
    %vm341 = vcmp.eq.s32.totalorder %v336, 2
    %v342 = vxor.u32 %v333, 2147483648
    %v343 = vsel %vm341, %v342, %v334
    %v344 = vsel %vm337, %v340, %v343
    %v345 = vsel %vm335, nan, %v344
    %v346 = vand.u32 2147483647, %v32
    %vm347 = vcmp.le.f32.partialorder %v346, 0.7853982
    %vm348 = vcmp.lt.s32.totalorder %v32, 0
    %v349 = vand.u32 %v32, 2139095040
    %v350 = vshrl.u32 %v349, 23
    %v351 = vsub.s32 %v350, 127
    %v352 = vand.u32 2147483647, %v32
    %v353 = vand.u32 %v352, 8388607
    %v354 = vor.u32 %v353, 8388608
    %v355 = vsub.s32 0, %v354
    %v356 = vadd.s32 %v351, 1
    %vm357 = vcmp.gt.s32.totalorder %v356, 0
    %v358 = vsel %vm357, %v356, 0
    %v359 = vshrl.u32 %v358, 5
    %v360 = vand.u32 %v358, 31
    %v361 = vsub.s32 32, %v360
    %v362 = vshrl.u32 683565275, %v361
    %v363 = vshll.u32 683565275, %v360
    %v364 = vshrl.u32 2475754826, %v361
    %v365 = vor.u32 %v363, %v364
    %v366 = vshll.u32 2475754826, %v360
    %v367 = vshrl.u32 2131351028, %v361
    %v368 = vor.u32 %v366, %v367
    %v369 = vshll.u32 2131351028, %v360
    %v370 = vshrl.u32 2102212464, %v361
    %v371 = vor.u32 %v369, %v370
    %v372 = vshll.u32 2102212464, %v360
    %v373 = vshrl.u32 920167782, %v361
    %v374 = vor.u32 %v372, %v373
    %v375 = vshll.u32 920167782, %v360
    %v376 = vshrl.u32 1326507024, %v361
    %v377 = vor.u32 %v375, %v376
    %vm378 = vcmp.lt.s32.totalorder %v359, 1
    %vm379 = vcmp.lt.s32.totalorder %v359, 2
    %vm380 = vcmp.lt.s32.totalorder %v359, 3
    %vm381 = vcmp.lt.s32.totalorder %v359, 4
    %v382 = vsel %vm378, %v362, %v365
    %v383 = vsel %vm381, %v371, 2102212464
    %v384 = vsel %vm380, %v368, %v383
    %v385 = vsel %vm379, %v382, %v384
    %v386 = vsel %vm378, %v365, %v368
    %v387 = vsel %vm381, %v374, 920167782
    %v388 = vsel %vm380, %v371, %v387
    %v389 = vsel %vm379, %v386, %v388
    %v390 = vsel %vm378, %v368, %v371
    %v391 = vsel %vm381, %v377, 1326507024
    %v392 = vsel %vm380, %v374, %v391
    %v393 = vsel %vm379, %v390, %v392
    %v394 = vshll.u32 %v354, 8
    %v395 = vmul.u32.u64.compose %v394, %v393
    %v396 = vextract.low.u32 %v395
    %v397 = vextract.high.u32 %v395
    %v398 = vmul.u32.u64.compose %v394, %v389
    %v399 = vextract.low.u32 %v398
    %v400 = vextract.high.u32 %v398
    %v401 = vmul.u32 %v394, %v385
    %v402 = vadd.s32 %v397, %v399
    %vm403 = vc.u32 %v397, %v399
    %v404 = vadd.s32 %v400, 1
    %v405 = vsel %vm403, %v404, %v400
    %v406 = vadd.s32 %v401, %v405
    %v407 = vadd.s32 %v406, 536870912
    %v408 = vshrl.u32 %v407, 30
    %v409 = vshll.u32 %v408, 30
    %v410 = vsub.s32 %v406, %v409
    %vm411 = vcmp.lt.s32.totalorder %v410, 0
    %v412 = vsub.s32 0, %v410
    %v413 = vsel %vm411, %v412, %v410
    %v414 = vclz %v413
    %v415 = vsub.s32 %v414, 2
    %vm416 = vcmp.gt.s32.totalorder 0, %v415
    %v417 = vsel %vm416, 0, %v415
    %v418 = vsub.s32 32, %v417
    %v419 = vshll.u32 %v410, %v417
    %v420 = vshrl.u32 %v402, %v418
    %v421 = vor.u32 %v419, %v420
    %v422 = vsub.s32 4294967266, %v417
    %v423 = vadd.s32 %v422, 127
    %v424 = vshll.u32 %v423, 23
    %v425 = vor.u32 4788187, %v424
    %v426 = vand.u32 2147483647, %v425
    %v428 = vcvt.s32.f32 %v421
    %v429 = vmul.f32 %v428, %v426
    %v430 = vxor.u32 %v429, 2147483648
    %v431 = vsel %vm348, %v430, %v429
    %v432 = vsub.s32 4, %v408
    %v433 = vsel %vm348, %v432, %v408
    %v434 = vsel %vm347, %v32, %v431
    %v435 = vsel %vm347, 0, %v433
    %v436 = vcosq.f32.pop %v434
    %v437 = vsinq.f32.pop %v434
    %vm438 = vweird.f32 %v32
    %v439 = vand.u32 %v435, 3
    %vm440 = vcmp.lt.s32.totalorder %v439, 2
    %vm441 = vcmp.eq.s32.totalorder %v439, 0
    %v442 = vxor.u32 %v437, 2147483648
    %v443 = vsel %vm441, %v436, %v442
    %vm444 = vcmp.eq.s32.totalorder %v439, 2
    %v445 = vxor.u32 %v436, 2147483648
    %v446 = vsel %vm444, %v445, %v437
    %v447 = vsel %vm440, %v443, %v446
    %v448 = vsel %vm438, nan, %v447
    %449 = vst [vmem:[#allocation2 + $0x10] sm:$0xff] %v345
    %450 = vst [vmem:[#allocation2 + $0x18] sm:$0xff] %v448
    // Predicated region
    $region10: #{tpu_custom_call.1} parent=1 // pred_check
      _
    $region11: #{tpu_custom_call.1} parent=1 // pred_check_branch
      %452 = sbr.rel (0) target = $region13
    $region12: #{tpu_custom_call.1} parent=1 // pred_region
      %s454 = ssub.s32 512, 512
      %455 = vsyncadd [#allocation3], %s454
      %s457 = sshll.u32 [#allocation2], 4
      %s458 = int_to_ptr.vmem [resolvable:$true] %s457
      %460 = dma.vmem_to_hbm [thread:$0]  %s458, 512, %s2, [#allocation3]
    $region13: #{tpu_custom_call.1} parent=1 // pred_fallthru
      _
    // Predicated region
    $region14: #{tpu_custom_call.1} parent=1 // pred_check
      _
    $region15: #{tpu_custom_call.1} parent=1 // pred_check_branch
      %462 = sbr.rel (0) target = $region17
    $region16: #{tpu_custom_call.1} parent=1 // pred_region
      %463 = dma.done [#allocation3], 512
    $region17: #{tpu_custom_call.1} parent=1 // pred_fallthru
      _
    %464 = vsyncpa [#allocation3], 1

</llo_original>
